<compile_context>
chip_gen: v5e
topology: v5e:2x2
jax: 0.10.0
libtpu: 0.0.40
codegen_flags: <defaults>
</compile_context>

<pallas_src>
import jax
import jax.numpy as jnp
from jax.experimental import pallas as pl
from jax.experimental.pallas import tpu as pltpu


def _l2_normalize_kernel(x_ref, o_ref):
    # x_ref / o_ref: (TB, Dp) tile in VMEM.  Padded lanes/rows are zero, so the
    # squared-sum reduction and the scale are unaffected by padding.
    x = x_ref[...]
    xf = x.astype(jnp.float32)  # no-op for f32 inputs; reduction is done in f32
    sq = jnp.sum(xf * xf, axis=-1, keepdims=True)
    # torch.nn.functional.normalize: x / max(||x||_2, eps), eps = 1e-12.
    # Clamp *inside* the rsqrt as eps^2 so a single EUP rsqrt + one vmul suffices.
    inv = jax.lax.rsqrt(jnp.maximum(sq, jnp.float32(1e-24)))
    o_ref[...] = (xf * inv).astype(o_ref.dtype)


def _round_up(n, m):
    return ((n + m - 1) // m) * m


def l2_normalize(x, *, tb=None, vmem_limit_bytes=32 << 20):
    """Row-wise L2 normalization (dim=1) of a (B, D) feature matrix."""
    B, D = x.shape
    orig_dtype = x.dtype
    itemsize = jnp.dtype(orig_dtype).itemsize

    # Lane-dense output: pad feature dim to a multiple of 128 (zero padding does
    # not change the L2 norm).  Avoids masked partial stores for odd widths.
    D_pad = _round_up(D, 128)
    if D_pad != D:
        x = jnp.pad(x, ((0, 0), (0, D_pad - D)))

    # Pick the row tile: as large as possible (HBM-bandwidth-bound kernel) while
    # keeping one tile around ~4 MiB, so 2-deep buffering of (in + out) stays
    # comfortably inside scoped VMEM on v5e/v6e/v7x.
    if tb is None:
        budget = 4 << 20  # bytes per tile buffer
        rows = budget // max(D_pad * itemsize, 1)
        tb = max(8, min(1024, (rows // 8) * 8))
    # Don't over-pad tiny batches: tile never exceeds the (8-aligned) batch.
    tb = min(tb, _round_up(B, 8))

    grid_b = pl.cdiv(B, tb)
    B_pad = grid_b * tb
    if B_pad != B:
        x = jnp.pad(x, ((0, B_pad - B), (0, 0)))  # zero rows normalize to zero

    out = pl.pallas_call(
        _l2_normalize_kernel,
        out_shape=jax.ShapeDtypeStruct((B_pad, D_pad), orig_dtype),
        grid=(grid_b,),
        in_specs=[pl.BlockSpec((tb, D_pad), lambda i: (i, 0))],
        out_specs=pl.BlockSpec((tb, D_pad), lambda i: (i, 0)),
        compiler_params=pltpu.CompilerParams(
            dimension_semantics=("parallel",),      # lets v7x shard rows over 2 TCs
            vmem_limit_bytes=vmem_limit_bytes,      # > v5e's 16 MiB scoped default
        ),
    )(x)

    if B_pad != B or D_pad != D:
        out = out[:B, :D]
    return out


class Lambda:
    """JAX port of the PyTorch `Lambda` nn.Module: applies `lambd` in forward."""

    def __init__(self, lambd):
        self.lambd = lambd

    def __call__(self, x):
        return self.lambd(x)


if __name__ == "__main__":
    key = jax.random.PRNGKey(0)
    # Deliberately non-multiple shapes to exercise the row/lane padding paths.
    B, D = 12, 96
    x = jax.random.normal(key, (B, D), dtype=jnp.float32)

    # Mirrors `Lambda(lambda x: F.normalize(x))` in the PyTorch script.
    module = Lambda(lambda t: l2_normalize(t))

    out = jax.block_until_ready(module(x))

    # Pure-JAX reference with identical semantics to F.normalize (eps=1e-12).
    ref = x / jnp.maximum(jnp.linalg.norm(x, axis=1, keepdims=True), 1e-12)
    assert out.shape == (B, D)
    assert out.dtype == x.dtype
    assert jnp.allclose(out, ref, atol=1e-5, rtol=1e-5)

    # Second shape: already-aligned case (no padding), larger batch.
    x2 = jax.random.normal(jax.random.PRNGKey(1), (64, 128), dtype=jnp.float32)
    out2 = jax.block_until_ready(module(x2))
    ref2 = x2 / jnp.maximum(jnp.linalg.norm(x2, axis=1, keepdims=True), 1e-12)
    assert jnp.allclose(out2, ref2, atol=1e-5, rtol=1e-5)

    print("KERNEL_OK")
</pallas_src>

<mosaic_0001>
module attributes {stable_mosaic.version = 11 : i64} {
  func.func @_l2_normalize_kernel(%arg0: i32, %arg1: memref<16x128xf32, #tpu.memory_space<vmem>>, %arg2: memref<16x128xf32, #tpu.memory_space<vmem>>) attributes {dimension_semantics = [#tpu.dimension_semantics<parallel>], iteration_bounds = array<i64: 1>, scalar_prefetch = 0 : i64, scratch_operands = 0 : i64, tpu.core_type = #tpu.core_type<tc>, window_params = [{transform_indices = @transform_0, window_bounds = array<i64: 16, 128>}, {transform_indices = @transform_1, window_bounds = array<i64: 16, 128>}]} {
    %c0 = arith.constant 0 : index
    %c0_0 = arith.constant 0 : index
    %0 = vector.load %arg1[%c0, %c0_0] : memref<16x128xf32, #tpu.memory_space<vmem>>, vector<16x128xf32>
    %1 = arith.mulf %0, %0 : vector<16x128xf32>
    %cst = arith.constant dense<0.000000e+00> : vector<16xf32>
    %2 = vector.multi_reduction <add>, %1, %cst [1] : vector<16x128xf32> to vector<16xf32>
    %3 = vector.shape_cast %2 : vector<16xf32> to vector<16x1xf32>
    %cst_1 = arith.constant 1.000000e-24 : f32
    %4 = vector.broadcast %cst_1 : f32 to vector<16x1xf32>
    %5 = arith.maximumf %3, %4 : vector<16x1xf32>
    %6 = math.rsqrt %5 : vector<16x1xf32>
    %7 = vector.broadcast %6 : vector<16x1xf32> to vector<16x128xf32>
    %8 = arith.mulf %0, %7 : vector<16x128xf32>
    %c0_2 = arith.constant 0 : index
    %c0_3 = arith.constant 0 : index
    %9 = vector.load %arg2[%c0_2, %c0_3] : memref<16x128xf32, #tpu.memory_space<vmem>>, vector<16x128xf32>
    tpu.vector_store %arg2[%c0_2, %c0_3], %8 {strides = array<i32>} : memref<16x128xf32, #tpu.memory_space<vmem>>, vector<16x128xf32>,
    return
  }
  func.func @transform_0(%arg0: i32) -> (i32, i32) {
    %c0_i32 = arith.constant 0 : i32
    %c0_i32_0 = arith.constant 0 : i32
    return %arg0, %c0_i32 : i32, i32
  }
  func.func @transform_1(%arg0: i32) -> (i32, i32) {
    %c0_i32 = arith.constant 0 : i32
    %c0_i32_0 = arith.constant 0 : i32
    return %arg0, %c0_i32 : i32, i32
  }
}

</mosaic_0001>

<llo_original>
// kernel: tpu_custom_call.1
$region0: #{tpu_custom_call.1}
  #allocation0 [shape = 'u32[]', space=smem, size = 0x4, offset = 0x4, fixed_abs, tag = 'smem constant byte address 0x4 - core index']
  #allocation1 [shape = 'u32[72,128]{1,0:T(1,128)}', space=vmem, size = 0x9000, scoped, tag = 'internal scratch']
  %s0 = inlined_call_operand.hbm [shape: f32[16,128], index: 0, kind: input, shape index: {}]
  %s1 = inlined_call_operand.hbm [shape: f32[16,128], index: 1, kind: output, shape index: {}]
  %s2 = sld [smem:[#allocation0]]
  $region18: #{tpu_custom_call.1} parent=0
    _
  %s4 = ssub.s32 1, %s2
  %s5 = scalar_select 0, %s4, %s2
  $region1: #{tpu_custom_call.1} parent=0
    #allocation2 [shape = 'u8[8192]{0}', space=vmem, size = 0x2000, scoped, tag = 'input window, operand 0, single buffered']
    #allocation3 [shape = 's32[1]{0}', space=sflag, size = 0x4, scoped, tag = 'scoped memory for tpu_custom_call.1']
    #allocation4 [shape = 's32[1]{0}', space=sflag, size = 0x4, scoped, tag = 'scoped memory for tpu_custom_call.1']
    #allocation5 [shape = 'u8[8192]{0}', space=vmem, size = 0x2000, scoped, tag = 'output window, operand 0, single buffered']
    %6 = vsyncpa [#allocation3], 0
    %7 = vsyncpa [#allocation4], 0
    // Predicated region
    $region2: #{tpu_custom_call.1} parent=1 // pred_check
      _
    $region3: #{tpu_custom_call.1} parent=1 // pred_check_branch
      %9 = sbr.rel (0) target = $region5
    $region4: #{tpu_custom_call.1} parent=1 // pred_region
      %11 = vsyncadd [#allocation3], 0
      %s12 = sshll.u32 %s0, 4
      %s13 = int_to_ptr.hbm [resolvable:$true] %s12
      %s14 = sshll.u32 [#allocation2], 4
      %s15 = int_to_ptr.vmem [resolvable:$true] %s14
      %20 = dma.hbm_to_vmem [thread:$0]  %s13, 256, %s15, [#allocation3], 128, 128, 8
    $region5: #{tpu_custom_call.1} parent=1 // pred_fallthru
      _
    // Predicated region
    $region6: #{tpu_custom_call.1} parent=1 // pred_check
      _
    $region7: #{tpu_custom_call.1} parent=1 // pred_check_branch
      %22 = sbr.rel (0) target = $region9
    $region8: #{tpu_custom_call.1} parent=1 // pred_region
      %24 = dma.done [#allocation3], 256
    $region9: #{tpu_custom_call.1} parent=1 // pred_fallthru
      _
    %v25 = vld [vmem:[#allocation2] sm:$0xff]
    %v26 = vld [vmem:[#allocation2 + $0x8] sm:$0xff]
    %v27 = vmul.f32 %v25, %v25
    %v28 = vmul.f32 %v26, %v26
    %29 = vadd.xlane.f32.xlu0 %v27
    %v30 = vpop.xlane.xlu0 %29
    %31 = vadd.xlane.f32.xlu0 %v28
    %v32 = vpop.xlane.xlu0 %31
    %v33 = vmax.f32 %v30, 1e-24
    %v34 = vmax.f32 %v32, 1e-24
    %v35 = vrsqrt.pop %v33
    %v36 = vmul.f32 %v35, %v33
    %v37 = vmul.f32 %v36, %v35
    %v38 = vmul.f32 0.5, %v37
    %v39 = vsub.f32 1.5, %v38
    %v40 = vmul.f32 %v35, %v39
    %vm41 = vweird.f32 %v33
    %vm42 = vweird.f32 %v35
    %vm43 = vmor %vm41, %vm42
    %v44 = vsel %vm43, %v35, %v40
    %v45 = vrsqrt.pop %v34
    %v46 = vmul.f32 %v45, %v34
    %v47 = vmul.f32 %v46, %v45
    %v48 = vmul.f32 0.5, %v47
    %v49 = vsub.f32 1.5, %v48
    %v50 = vmul.f32 %v45, %v49
    %vm51 = vweird.f32 %v34
    %vm52 = vweird.f32 %v45
    %vm53 = vmor %vm51, %vm52
    %v54 = vsel %vm53, %v45, %v50
    %v55 = vmul.f32 %v25, %v44
    %v56 = vmul.f32 %v26, %v54
    %57 = vst [vmem:[#allocation5] sm:$0xff] %v55
    %58 = vst [vmem:[#allocation5 + $0x8] sm:$0xff] %v56
    // Predicated region
    $region10: #{tpu_custom_call.1} parent=1 // pred_check
      _
    $region11: #{tpu_custom_call.1} parent=1 // pred_check_branch
      %60 = sbr.rel (0) target = $region13
    $region12: #{tpu_custom_call.1} parent=1 // pred_region
      %62 = vsyncadd [#allocation4], 0
      %s63 = sshll.u32 [#allocation5], 4
      %s64 = int_to_ptr.vmem [resolvable:$true] %s63
      %s65 = sshll.u32 %s1, 4
      %s66 = int_to_ptr.hbm [resolvable:$true] %s65
      %71 = dma.vmem_to_hbm [thread:$0]  %s64, 256, %s66, [#allocation4], 128, 128, 8
    $region13: #{tpu_custom_call.1} parent=1 // pred_fallthru
      _
    // Predicated region
    $region14: #{tpu_custom_call.1} parent=1 // pred_check
      _
    $region15: #{tpu_custom_call.1} parent=1 // pred_check_branch
      %73 = sbr.rel (0) target = $region17
    $region16: #{tpu_custom_call.1} parent=1 // pred_region
      %75 = dma.done [#allocation4], 256
    $region17: #{tpu_custom_call.1} parent=1 // pred_fallthru
      _
    %76 = vsyncpa [#allocation3], 1
    %77 = vsyncpa [#allocation4], 1

</llo_original>
